<compile_context>
chip_gen: v7x
topology: tpu7x:2x2x1
jax: 0.10.0
libtpu: 0.0.40
codegen_flags: <defaults>
</compile_context>

<pallas_src>
import functools

import jax
import jax.numpy as jnp
from jax.experimental import pallas as pl
from jax.experimental.pallas import tpu as pltpu


BN_EPS = 1e-5
LANES = 128          # lane width: every feature dim is zero-padded to this
SUBLANES_F32 = 8     # f32 sublane tile (activation row padding, bias slab bands)
SUBLANES_BF16 = 16   # bf16 sublane tile (weight slab fan_in padding / alignment)


def _round_up(x, m):
    return (x + m - 1) // m * m


# -----------------------------------------------------------------------------
# Kernel
# -----------------------------------------------------------------------------
def _make_kernel(n_hidden, layer_meta, n_valid, n_pad):
    """One grid step = one independent micro-batch (its own BN statistics).

    layer_meta[i] = (w_row_offset, k_pad); bias of layer i sits at row 8*i of b_ref.
    Everything lives in VMEM; weights/biases are resident across the grid.
    """
    inv_n = 1.0 / float(n_valid)

    def kernel(x_ref, w_ref, b_ref, out_ref):
        x = x_ref[...]                                        # [n_pad, 128] f32

        # Row mask only needed if rows were padded (padded rows would otherwise
        # contaminate the batch statistics via the bias).
        if n_pad != n_valid:
            row = jax.lax.broadcasted_iota(jnp.int32, (n_pad, 1), 0)
            row_mask = (row < n_valid).astype(jnp.float32)

        for li in range(n_hidden + 1):
            w_off, k_pad = layer_meta[li]
            w = w_ref[w_off:w_off + k_pad, :]                 # [k_pad, 128] bf16
            b = b_ref[li * SUBLANES_F32:li * SUBLANES_F32 + 1, :]  # [1, 128] f32

            # bf16 operands -> native MXU path, f32 accumulation; bias add in f32.
            xb = x.astype(jnp.bfloat16)[:, :k_pad]
            h = jnp.dot(xb, w, preferred_element_type=jnp.float32) + b

            if li == n_hidden:                                # final Linear
                out_ref[...] = h.astype(out_ref.dtype)        # lane-dense [n_pad,128]
            else:
                h = jnp.maximum(h, 0.0)                       # ReLU
                # BatchNorm1d (training mode), centered two-pass variance, f32.
                # gamma/beta are folded into the NEXT layer's W/b host-side.
                hm = h * row_mask if n_pad != n_valid else h
                mean = jnp.sum(hm, axis=0, keepdims=True) * inv_n
                d = h - mean
                dm = d * row_mask if n_pad != n_valid else d
                var = jnp.sum(dm * dm, axis=0, keepdims=True) * inv_n
                x = d * jax.lax.rsqrt(var + BN_EPS)

    return kernel


# -----------------------------------------------------------------------------
# Host-side parameter prep
# -----------------------------------------------------------------------------
def init_params(key, in_dim, out_dim, hidden_dim):
    """Linear init mimics PyTorch: U(-1/sqrt(fan_in), 1/sqrt(fan_in)) for W and b.
    BatchNorm1d affine params are randomized here (PyTorch default is gamma=1,
    beta=0) so the gamma/beta folding is actually exercised by the checks."""
    dims = [in_dim] + list(hidden_dim) + [out_dim]
    params = []
    for li in range(len(dims) - 1):
        fan_in, fan_out = dims[li], dims[li + 1]
        key, kw, kb, kg, kbt = jax.random.split(key, 5)
        bound = 1.0 / jnp.sqrt(jnp.float32(fan_in))
        w = jax.random.uniform(kw, (fan_in, fan_out), jnp.float32, -bound, bound)
        b = jax.random.uniform(kb, (1, fan_out), jnp.float32, -bound, bound)
        layer = {"w": w, "b": b}
        if li < len(hidden_dim):
            layer["gamma"] = jax.random.uniform(kg, (1, fan_out), jnp.float32, 0.5, 1.5)
            layer["beta"] = 0.1 * jax.random.normal(kbt, (1, fan_out), jnp.float32)
        params.append(layer)
    return params


def fold_and_pad_params(params):
    """Fold BN gamma/beta of hidden layer i into layer i+1's W/b
    (W' = gamma[:,None]*W, b' = beta@W + b), pad each weight's fan_in to the next
    multiple of 16 sublanes and fan_out to 128 lanes, and pack:
      * all weights into ONE bf16 slab [sum(k_pad), 128]
      * all biases into a small f32 slab [n_layers*8, 128] (one aligned band each).

    Returns (w_slab_bf16, b_slab_f32, layer_meta) with layer_meta[i] = (w_row, k_pad).
    """
    folded = []
    for i, layer in enumerate(params):
        w = jnp.asarray(layer["w"], jnp.float32)              # [fan_in, fan_out]
        b = jnp.asarray(layer["b"], jnp.float32).reshape(1, -1)
        if i > 0 and "gamma" in params[i - 1]:
            g = jnp.asarray(params[i - 1]["gamma"], jnp.float32).reshape(-1, 1)
            beta = jnp.asarray(params[i - 1]["beta"], jnp.float32).reshape(1, -1)
            b = beta @ w + b                                  # uses ORIGINAL w
            w = g * w
        folded.append((w, b))

    n_layers = len(folded)
    w_pieces, meta, row = [], [], 0
    b_slab = jnp.zeros((n_layers * SUBLANES_F32, LANES), jnp.float32)
    for i, (w, b) in enumerate(folded):
        fan_in, fan_out = w.shape
        assert fan_in <= LANES and fan_out <= LANES, "layer dim exceeds 128-lane pad"
        k_pad = _round_up(fan_in, SUBLANES_BF16)              # tight fan_in padding
        w_pad = jnp.zeros((k_pad, LANES), jnp.float32).at[:fan_in, :fan_out].set(w)
        w_pieces.append(w_pad)
        b_slab = b_slab.at[i * SUBLANES_F32, :fan_out].set(b[0])
        meta.append((row, k_pad))
        row += k_pad
    w_slab = jnp.concatenate(w_pieces, axis=0).astype(jnp.bfloat16)
    return w_slab, b_slab, tuple(meta)


# -----------------------------------------------------------------------------
# Wrapper
# -----------------------------------------------------------------------------
@functools.partial(
    jax.jit, static_argnames=("in_dim", "out_dim", "n_hidden", "layer_meta"))
def simple_bvh_net_bn_forward(x, w_slab, b_slab, *, in_dim, out_dim, n_hidden,
                              layer_meta):
    """x: [M, B, J, in_dim//J]  (M independent micro-batches, each one module
    forward with its own BN statistics) or [B, J, in_dim//J].  Returns
    [M, B, 22, out_dim//22] (resp. [B, 22, out_dim//22])."""
    single = x.ndim == 3
    xmb = x[None] if single else x
    m = xmb.shape[0]

    x2 = xmb.reshape(m, -1, in_dim).astype(jnp.float32)       # [M, N, in_dim]
    n_valid = x2.shape[1]
    n_pad = _round_up(n_valid, SUBLANES_F32)
    x_pad = jnp.zeros((m, n_pad, LANES), jnp.float32).at[:, :n_valid, :in_dim].set(x2)

    kernel = _make_kernel(n_hidden, layer_meta, n_valid, n_pad)

    k_total = sum(k for _, k in layer_meta)
    flops = 2 * m * n_pad * LANES * k_total
    bytes_accessed = (x_pad.size * 4 + m * n_pad * LANES * 4      # x + out (f32)
                      + w_slab.size * 2 + b_slab.size * 4)        # resident params

    out = pl.pallas_call(
        kernel,
        grid=(m,),
        out_shape=jax.ShapeDtypeStruct((m, n_pad, LANES), jnp.float32),
        in_specs=[
            # Streamed per micro-batch (leading dim squeezed out of the kernel ref).
            pl.BlockSpec((None, n_pad, LANES), lambda i: (i, 0, 0)),
            # Parameter slabs: constant block index -> VMEM-resident across the grid.
            pl.BlockSpec(w_slab.shape, lambda i: (0, 0)),
            pl.BlockSpec(b_slab.shape, lambda i: (0, 0)),
        ],
        out_specs=pl.BlockSpec((None, n_pad, LANES), lambda i: (i, 0, 0)),
        compiler_params=pltpu.CompilerParams(dimension_semantics=("parallel",)),
        cost_estimate=pl.CostEstimate(
            flops=flops, transcendentals=m * n_hidden * LANES,
            bytes_accessed=bytes_accessed),
    )(x_pad, w_slab, b_slab)

    out = out[:, :n_valid, :out_dim].reshape(m, -1, 22, out_dim // 22)
    return out[0] if single else out


# -----------------------------------------------------------------------------
# References
# -----------------------------------------------------------------------------
def reference_forward(x, params, in_dim, out_dim):
    """Full-f32 reference matching the PyTorch module (training-mode BN) for ONE
    micro-batch [B, J, in_dim//J]."""
    h = x.reshape(-1, in_dim).astype(jnp.float32)
    for layer in params[:-1]:
        h = h @ layer["w"] + layer["b"]
        h = jnp.maximum(h, 0.0)
        mean = jnp.mean(h, axis=0, keepdims=True)
        var = jnp.mean((h - mean) ** 2, axis=0, keepdims=True)
        h = (h - mean) / jnp.sqrt(var + BN_EPS)
        h = h * layer["gamma"] + layer["beta"]
    h = h @ params[-1]["w"] + params[-1]["b"]
    return h.reshape(-1, 22, out_dim // 22)


def folded_reference_forward(x, w_slab, b_slab, layer_meta, in_dim, out_dim,
                             n_hidden):
    """Plain-JAX reference mirroring the kernel's math exactly (same folded bf16
    weights / f32 biases, f32 BN statistics) for ONE micro-batch."""
    h = x.reshape(-1, in_dim).astype(jnp.float32)
    hp = jnp.zeros((h.shape[0], LANES), jnp.float32).at[:, :in_dim].set(h)
    for li in range(n_hidden + 1):
        w_off, k_pad = layer_meta[li]
        w = w_slab[w_off:w_off + k_pad, :]
        b = b_slab[li * SUBLANES_F32:li * SUBLANES_F32 + 1, :]
        z = jnp.dot(hp.astype(jnp.bfloat16)[:, :k_pad], w,
                    preferred_element_type=jnp.float32) + b
        if li == n_hidden:
            hp = z
        else:
            z = jnp.maximum(z, 0.0)
            mean = jnp.mean(z, axis=0, keepdims=True)
            var = jnp.mean((z - mean) ** 2, axis=0, keepdims=True)
            hp = (z - mean) * jax.lax.rsqrt(var + BN_EPS)
    return hp[:, :out_dim].reshape(-1, 22, out_dim // 22)


if __name__ == "__main__":
    # Module config: input [B, J=22, in_dim//J]; out_dim divisible by 22.
    J = 22
    in_dim = J * 3            # 66
    out_dim = J * 2           # 44
    hidden_dim = [32, 64]
    B = 8                     # rows per module forward (BN batch size)
    M = 4                     # independent micro-batches fused into one pallas_call

    key = jax.random.PRNGKey(0)
    key, kx = jax.random.split(key)
    x = jax.random.normal(kx, (M, B, J, in_dim // J), jnp.float32)

    params = init_params(key, in_dim, out_dim, hidden_dim)
    w_slab, b_slab, layer_meta = fold_and_pad_params(params)

    out = simple_bvh_net_bn_forward(
        x, w_slab, b_slab, in_dim=in_dim, out_dim=out_dim,
        n_hidden=len(hidden_dim), layer_meta=layer_meta)
    out = jax.block_until_ready(out)
    assert out.shape == (M, B, 22, out_dim // 22), out.shape

    # Tight check vs. a plain-JAX reference using the IDENTICAL folded bf16 params
    # (validates the kernel math: fold, matmuls, ReLU, BN statistics).
    ref_folded = jnp.stack([
        folded_reference_forward(x[i], w_slab, b_slab, layer_meta,
                                 in_dim, out_dim, len(hidden_dim))
        for i in range(M)])
    assert jnp.allclose(out, ref_folded, atol=2e-3, rtol=2e-3), (
        float(jnp.max(jnp.abs(out - ref_folded))))

    # Loose check vs. the full-f32 PyTorch-faithful reference: remaining differences
    # come only from the intentional bf16 quantization of the matmul operands.
    ref_f32 = jnp.stack([
        reference_forward(x[i], params, in_dim, out_dim) for i in range(M)])
    assert float(jnp.max(jnp.abs(out - ref_f32))) < 0.1, (
        float(jnp.max(jnp.abs(out - ref_f32))))

    print("KERNEL_OK")
</pallas_src>

<mosaic_0001>
module attributes {stable_mosaic.version = 11 : i64} {
  func.func @kernel(%arg0: i32, %arg1: memref<1x8x128xf32, #tpu.memory_space<vmem>>, %arg2: memref<176x128xbf16, #tpu.memory_space<vmem>>, %arg3: memref<24x128xf32, #tpu.memory_space<vmem>>, %arg4: memref<1x8x128xf32, #tpu.memory_space<vmem>>) attributes {dimension_semantics = [#tpu.dimension_semantics<parallel>], iteration_bounds = array<i64: 4>, scalar_prefetch = 0 : i64, scratch_operands = 0 : i64, tpu.core_type = #tpu.core_type<tc>, window_params = [{transform_indices = @transform_0, window_bounds = array<i64: 1, 8, 128>}, {pipeline_mode = #tpu.pipeline_mode<synchronous>, transform_indices = @transform_1, window_bounds = array<i64: 176, 128>}, {pipeline_mode = #tpu.pipeline_mode<synchronous>, transform_indices = @transform_2, window_bounds = array<i64: 24, 128>}, {transform_indices = @transform_3, window_bounds = array<i64: 1, 8, 128>}]} {
    %c0 = arith.constant 0 : index
    %c0_0 = arith.constant 0 : index
    %c0_1 = arith.constant 0 : index
    %0 = vector.load %arg1[%c0, %c0_0, %c0_1] : memref<1x8x128xf32, #tpu.memory_space<vmem>>, vector<1x8x128xf32>
    %1 = vector.shape_cast %0 : vector<1x8x128xf32> to vector<8x128xf32>
    %c0_2 = arith.constant 0 : index
    %c0_3 = arith.constant 0 : index
    %2 = vector.load %arg2[%c0_2, %c0_3] : memref<176x128xbf16, #tpu.memory_space<vmem>>, vector<80x128xbf16>
    %c0_4 = arith.constant 0 : index
    %c0_5 = arith.constant 0 : index
    %3 = vector.load %arg3[%c0_4, %c0_5] : memref<24x128xf32, #tpu.memory_space<vmem>>, vector<1x128xf32>
    %4 = arith.truncf %1 : vector<8x128xf32> to vector<8x128xbf16>
    %5 = vector.extract_strided_slice %4 {offsets = [0, 0], sizes = [8, 80], strides = [1, 1]} : vector<8x128xbf16> to vector<8x80xbf16>
    %cst = arith.constant dense<0.000000e+00> : vector<8x128xf32>
    %6 = tpu.matmul %5, %2, %cst {dimension_numbers = #tpu.dot_dimension_numbers<[1], [0], [0], [1], [0, 0, 1, 1], [], []>} : vector<8x80xbf16>, vector<80x128xbf16>, vector<8x128xf32> -> vector<8x128xf32>
    %7 = vector.broadcast %3 : vector<1x128xf32> to vector<8x128xf32>
    %8 = arith.addf %6, %7 : vector<8x128xf32>
    %cst_6 = arith.constant 0.000000e+00 : f32
    %9 = vector.broadcast %cst_6 : f32 to vector<8x128xf32>
    %10 = arith.maximumf %8, %9 : vector<8x128xf32>
    %cst_7 = arith.constant dense<0.000000e+00> : vector<128xf32>
    %11 = vector.multi_reduction <add>, %10, %cst_7 [0] : vector<8x128xf32> to vector<128xf32>
    %12 = vector.shape_cast %11 : vector<128xf32> to vector<1x128xf32>
    %cst_8 = arith.constant 1.250000e-01 : f32
    %13 = vector.broadcast %cst_8 : f32 to vector<1x128xf32>
    %14 = arith.mulf %12, %13 : vector<1x128xf32>
    %15 = vector.broadcast %14 : vector<1x128xf32> to vector<8x128xf32>
    %16 = arith.subf %10, %15 : vector<8x128xf32>
    %17 = arith.mulf %16, %16 : vector<8x128xf32>
    %cst_9 = arith.constant dense<0.000000e+00> : vector<128xf32>
    %18 = vector.multi_reduction <add>, %17, %cst_9 [0] : vector<8x128xf32> to vector<128xf32>
    %19 = vector.shape_cast %18 : vector<128xf32> to vector<1x128xf32>
    %cst_10 = arith.constant 1.250000e-01 : f32
    %20 = vector.broadcast %cst_10 : f32 to vector<1x128xf32>
    %21 = arith.mulf %19, %20 : vector<1x128xf32>
    %cst_11 = arith.constant 9.99999974E-6 : f32
    %22 = vector.broadcast %cst_11 : f32 to vector<1x128xf32>
    %23 = arith.addf %21, %22 : vector<1x128xf32>
    %24 = math.rsqrt %23 : vector<1x128xf32>
    %25 = vector.broadcast %24 : vector<1x128xf32> to vector<8x128xf32>
    %26 = arith.mulf %16, %25 : vector<8x128xf32>
    %c80 = arith.constant 80 : index
    %c0_12 = arith.constant 0 : index
    %27 = vector.load %arg2[%c80, %c0_12] : memref<176x128xbf16, #tpu.memory_space<vmem>>, vector<32x128xbf16>
    %c8 = arith.constant 8 : index
    %c0_13 = arith.constant 0 : index
    %28 = vector.load %arg3[%c8, %c0_13] : memref<24x128xf32, #tpu.memory_space<vmem>>, vector<1x128xf32>
    %29 = arith.truncf %26 : vector<8x128xf32> to vector<8x128xbf16>
    %30 = vector.extract_strided_slice %29 {offsets = [0, 0], sizes = [8, 32], strides = [1, 1]} : vector<8x128xbf16> to vector<8x32xbf16>
    %cst_14 = arith.constant dense<0.000000e+00> : vector<8x128xf32>
    %31 = tpu.matmul %30, %27, %cst_14 {dimension_numbers = #tpu.dot_dimension_numbers<[1], [0], [0], [1], [0, 0, 1, 1], [], []>} : vector<8x32xbf16>, vector<32x128xbf16>, vector<8x128xf32> -> vector<8x128xf32>
    %32 = vector.broadcast %28 : vector<1x128xf32> to vector<8x128xf32>
    %33 = arith.addf %31, %32 : vector<8x128xf32>
    %cst_15 = arith.constant 0.000000e+00 : f32
    %34 = vector.broadcast %cst_15 : f32 to vector<8x128xf32>
    %35 = arith.maximumf %33, %34 : vector<8x128xf32>
    %cst_16 = arith.constant dense<0.000000e+00> : vector<128xf32>
    %36 = vector.multi_reduction <add>, %35, %cst_16 [0] : vector<8x128xf32> to vector<128xf32>
    %37 = vector.shape_cast %36 : vector<128xf32> to vector<1x128xf32>
    %cst_17 = arith.constant 1.250000e-01 : f32
    %38 = vector.broadcast %cst_17 : f32 to vector<1x128xf32>
    %39 = arith.mulf %37, %38 : vector<1x128xf32>
    %40 = vector.broadcast %39 : vector<1x128xf32> to vector<8x128xf32>
    %41 = arith.subf %35, %40 : vector<8x128xf32>
    %42 = arith.mulf %41, %41 : vector<8x128xf32>
    %cst_18 = arith.constant dense<0.000000e+00> : vector<128xf32>
    %43 = vector.multi_reduction <add>, %42, %cst_18 [0] : vector<8x128xf32> to vector<128xf32>
    %44 = vector.shape_cast %43 : vector<128xf32> to vector<1x128xf32>
    %cst_19 = arith.constant 1.250000e-01 : f32
    %45 = vector.broadcast %cst_19 : f32 to vector<1x128xf32>
    %46 = arith.mulf %44, %45 : vector<1x128xf32>
    %cst_20 = arith.constant 9.99999974E-6 : f32
    %47 = vector.broadcast %cst_20 : f32 to vector<1x128xf32>
    %48 = arith.addf %46, %47 : vector<1x128xf32>
    %49 = math.rsqrt %48 : vector<1x128xf32>
    %50 = vector.broadcast %49 : vector<1x128xf32> to vector<8x128xf32>
    %51 = arith.mulf %41, %50 : vector<8x128xf32>
    %c112 = arith.constant 112 : index
    %c0_21 = arith.constant 0 : index
    %52 = vector.load %arg2[%c112, %c0_21] : memref<176x128xbf16, #tpu.memory_space<vmem>>, vector<64x128xbf16>
    %c16 = arith.constant 16 : index
    %c0_22 = arith.constant 0 : index
    %53 = vector.load %arg3[%c16, %c0_22] : memref<24x128xf32, #tpu.memory_space<vmem>>, vector<1x128xf32>
    %54 = arith.truncf %51 : vector<8x128xf32> to vector<8x128xbf16>
    %55 = vector.extract_strided_slice %54 {offsets = [0, 0], sizes = [8, 64], strides = [1, 1]} : vector<8x128xbf16> to vector<8x64xbf16>
    %cst_23 = arith.constant dense<0.000000e+00> : vector<8x128xf32>
    %56 = tpu.matmul %55, %52, %cst_23 {dimension_numbers = #tpu.dot_dimension_numbers<[1], [0], [0], [1], [0, 0, 1, 1], [], []>} : vector<8x64xbf16>, vector<64x128xbf16>, vector<8x128xf32> -> vector<8x128xf32>
    %57 = vector.broadcast %53 : vector<1x128xf32> to vector<8x128xf32>
    %58 = arith.addf %56, %57 : vector<8x128xf32>
    %c0_24 = arith.constant 0 : index
    %c0_25 = arith.constant 0 : index
    %c0_26 = arith.constant 0 : index
    %59 = vector.load %arg4[%c0_24, %c0_25, %c0_26] : memref<1x8x128xf32, #tpu.memory_space<vmem>>, vector<1x8x128xf32>
    %60 = vector.shape_cast %59 : vector<1x8x128xf32> to vector<8x128xf32>
    %61 = vector.shape_cast %58 : vector<8x128xf32> to vector<1x8x128xf32>
    tpu.vector_store %arg4[%c0_24, %c0_25, %c0_26], %61 {strides = array<i32>} : memref<1x8x128xf32, #tpu.memory_space<vmem>>, vector<1x8x128xf32>,
    return
  }
  func.func @transform_0(%arg0: i32) -> (i32, i32, i32) {
    %c0_i32 = arith.constant 0 : i32
    %c0_i32_0 = arith.constant 0 : i32
    %c0_i32_1 = arith.constant 0 : i32
    return %arg0, %c0_i32, %c0_i32_0 : i32, i32, i32
  }
  func.func @transform_1(%arg0: i32) -> (i32, i32) {
    %c0_i32 = arith.constant 0 : i32
    %c0_i32_0 = arith.constant 0 : i32
    %c0_i32_1 = arith.constant 0 : i32
    return %c0_i32, %c0_i32_0 : i32, i32
  }
  func.func @transform_2(%arg0: i32) -> (i32, i32) {
    %c0_i32 = arith.constant 0 : i32
    %c0_i32_0 = arith.constant 0 : i32
    %c0_i32_1 = arith.constant 0 : i32
    return %c0_i32, %c0_i32_0 : i32, i32
  }
  func.func @transform_3(%arg0: i32) -> (i32, i32, i32) {
    %c0_i32 = arith.constant 0 : i32
    %c0_i32_0 = arith.constant 0 : i32
    %c0_i32_1 = arith.constant 0 : i32
    return %arg0, %c0_i32, %c0_i32_0 : i32, i32, i32
  }
}

</mosaic_0001>

<llo_original>
// kernel: simple_bvh_net_bn_forward.1
$region0: #{simple_bvh_net_bn_forward.1}
  #allocation0 [shape = 'u32[]', space=smem, size = 0x4, offset = 0x4, fixed_abs, tag = 'smem constant byte address 0x4 - core index']
  #allocation1 [shape = 'u32[144,128]{1,0:T(1,128)}', space=vmem, size = 0x12000, scoped, tag = 'internal scratch']
  %s0 = inlined_call_operand.vmem [shape: f32[4,8,128], index: 0, kind: input, shape index: {}]
  %s1 = inlined_call_operand.vmem [shape: bf16[176,128], index: 1, kind: input, shape index: {}]
  %s2 = inlined_call_operand.vmem [shape: f32[24,128], index: 2, kind: input, shape index: {}]
  %s3 = inlined_call_operand.vmem [shape: f32[4,8,128], index: 3, kind: output, shape index: {}]
  %s4 = sld [smem:[#allocation0]]
  $region45: #{simple_bvh_net_bn_forward.1} parent=0
    _
  %s6 = ssub.s32 1, %s4
  %s7 = scalar_select 0, %s6, %s4
  loop: start=0, step=1, limit=6
  $region2: #{simple_bvh_net_bn_forward.1} parent=0 // loop_pre_header
    _
  $region3: #{simple_bvh_net_bn_forward.1} parent=0 // loop_header
    %s9 = sphi 0, %s13
    %p10 = scmp.ge.s32.totalorder %s9, 6
    %s19 = sphi 0, %s21
    %s22 = sphi 0, %s19
    %s23 = sphi 0, %s22
    %s39 = sphi 0, %s23
    %s43 = sphi 0, %s43
    %s45 = sphi 0, %s43
    %s46 = sphi 0, %s45
    %s60 = sphi 0, %s46
    %s64 = sphi 0, %s64
    %s66 = sphi 0, %s64
    %s67 = sphi 0, %s66
    %s81 = sphi 0, %s67
    %s87 = sphi 0, %s89
    %s90 = sphi 0, %s87
    %s91 = sphi 0, %s90
    %s107 = sphi 0, %s91
  $region4: #{simple_bvh_net_bn_forward.1} parent=0 // loop_header_branch
    %12 = sbr.rel (%p10) target = $region8
  $region5: #{simple_bvh_net_bn_forward.1} parent=0 // loop_body
    %s14 = ssub.s32 %s9, 1
    %s15 = ssub.s32 %s9, 2
    %s16 = sadd.s32 %s9, 1
    %s17 = ssub.s32 %s9, %s16
    %p18 = scmp.eq.s32.totalorder %s17, 0
    %s20 = sadd.s32 %s19, 1
    %s21 = scalar_select %p18, %s19, %s20
    %p24 = pneg %p18
    %p25 = scmp.eq.s32.totalorder %s9, 3
    %p26 = por %p24, %p25
    %p27 = scmp.ne.s32.totalorder %s19, %s22
    %p28 = scmp.eq.s32.totalorder %s9, 0
    %p29 = por %p27, %p28
    %p30 = scmp.ne.s32.totalorder %s19, %s22
    %p31 = scmp.eq.s32.totalorder %s14, 3
    %p32 = por %p30, %p31
    %p33 = scmp.ne.s32.totalorder %s22, %s23
    %p34 = scmp.eq.s32.totalorder %s14, 0
    %p35 = por %p33, %p34
    %p36 = scmp.ne.s32.totalorder %s22, %s23
    %p37 = scmp.eq.s32.totalorder %s15, 3
    %p38 = por %p36, %p37
    %p40 = scmp.ne.s32.totalorder %s23, %s39
    %p41 = scmp.eq.s32.totalorder %s15, 0
    %p42 = por %p40, %p41
    %s44 = sadd.s32 %s43, 1
    %p47 = scmp.eq.s32.totalorder %s9, 3
    %p48 = scmp.ne.s32.totalorder %s43, %s45
    %p49 = scmp.eq.s32.totalorder %s9, 0
    %p50 = por %p48, %p49
    %p51 = scmp.ne.s32.totalorder %s43, %s45
    %p52 = scmp.eq.s32.totalorder %s14, 3
    %p53 = por %p51, %p52
    %p54 = scmp.ne.s32.totalorder %s45, %s46
    %p55 = scmp.eq.s32.totalorder %s14, 0
    %p56 = por %p54, %p55
    %p57 = scmp.ne.s32.totalorder %s45, %s46
    %p58 = scmp.eq.s32.totalorder %s15, 3
    %p59 = por %p57, %p58
    %p61 = scmp.ne.s32.totalorder %s46, %s60
    %p62 = scmp.eq.s32.totalorder %s15, 0
    %p63 = por %p61, %p62
    %s65 = sadd.s32 %s64, 1
    %p68 = scmp.eq.s32.totalorder %s9, 3
    %p69 = scmp.ne.s32.totalorder %s64, %s66
    %p70 = scmp.eq.s32.totalorder %s9, 0
    %p71 = por %p69, %p70
    %p72 = scmp.ne.s32.totalorder %s64, %s66
    %p73 = scmp.eq.s32.totalorder %s14, 3
    %p74 = por %p72, %p73
    %p75 = scmp.ne.s32.totalorder %s66, %s67
    %p76 = scmp.eq.s32.totalorder %s14, 0
    %p77 = por %p75, %p76
    %p78 = scmp.ne.s32.totalorder %s66, %s67
    %p79 = scmp.eq.s32.totalorder %s15, 3
    %p80 = por %p78, %p79
    %p82 = scmp.ne.s32.totalorder %s67, %s81
    %p83 = scmp.eq.s32.totalorder %s15, 0
    %p84 = por %p82, %p83
    %s85 = ssub.s32 %s9, %s16
    %p86 = scmp.eq.s32.totalorder %s85, 0
    %s88 = sadd.s32 %s87, 1
    %s89 = scalar_select %p86, %s87, %s88
    %p92 = pneg %p86
    %p93 = scmp.eq.s32.totalorder %s9, 3
    %p94 = por %p92, %p93
    %p95 = scmp.ne.s32.totalorder %s87, %s90
    %p96 = scmp.eq.s32.totalorder %s9, 0
    %p97 = por %p95, %p96
    %p98 = scmp.ne.s32.totalorder %s87, %s90
    %p99 = scmp.eq.s32.totalorder %s14, 3
    %p100 = por %p98, %p99
    %p101 = scmp.ne.s32.totalorder %s90, %s91
    %p102 = scmp.eq.s32.totalorder %s14, 0
    %p103 = por %p101, %p102
    %p104 = scmp.ne.s32.totalorder %s90, %s91
    %p105 = scmp.eq.s32.totalorder %s15, 3
    %p106 = por %p104, %p105
    %p108 = scmp.ne.s32.totalorder %s91, %s107
    %p109 = scmp.eq.s32.totalorder %s15, 0
    %p110 = por %p108, %p109
    %p111 = scmp.le.s32.totalorder 1, %s9
    %p112 = scmp.lt.s32.totalorder %s9, 5
    %p113 = pnand %p111, %p112
    %p114 = pneg %p113
    // Predicated region
    $region9: #{simple_bvh_net_bn_forward.1} parent=5 // pred_check
      _
    $region10: #{simple_bvh_net_bn_forward.1} parent=5 // pred_check_branch
      %116 = sbr.rel (%p113) target = $region12
    $region11: #{simple_bvh_net_bn_forward.1} parent=5 // pred_region
      %s117 = ssub.s32 %s9, 1
      // Predicated region
      $region13: #{simple_bvh_net_bn_forward.1} parent=11 // pred_check
        %p118 = pneg %p56
      $region14: #{simple_bvh_net_bn_forward.1} parent=11 // pred_check_branch
        %120 = sbr.rel (%p118) target = $region16
      $region15: #{simple_bvh_net_bn_forward.1} parent=11 // pred_region
        _
      $region16: #{simple_bvh_net_bn_forward.1} parent=11 // pred_fallthru
        _
      // Predicated region
      $region17: #{simple_bvh_net_bn_forward.1} parent=11 // pred_check
        %p121 = pneg %p77
      $region18: #{simple_bvh_net_bn_forward.1} parent=11 // pred_check_branch
        %123 = sbr.rel (%p121) target = $region20
      $region19: #{simple_bvh_net_bn_forward.1} parent=11 // pred_region
        _
      $region20: #{simple_bvh_net_bn_forward.1} parent=11 // pred_fallthru
        _
    $region12: #{simple_bvh_net_bn_forward.1} parent=5 // pred_fallthru
      _
    %p124 = scmp.lt.s32.totalorder %s9, 4
    // Predicated region
    $region21: #{simple_bvh_net_bn_forward.1} parent=5 // pred_check
      %p125 = pneg %p124
    $region22: #{simple_bvh_net_bn_forward.1} parent=5 // pred_check_branch
      %127 = sbr.rel (%p125) target = $region24
    $region23: #{simple_bvh_net_bn_forward.1} parent=5 // pred_region
      // Predicated region
      $region25: #{simple_bvh_net_bn_forward.1} parent=23 // pred_check
        %p128 = pneg %p29
      $region26: #{simple_bvh_net_bn_forward.1} parent=23 // pred_check_branch
        %130 = sbr.rel (%p128) target = $region28
      $region27: #{simple_bvh_net_bn_forward.1} parent=23 // pred_region
        %p131 = scmp.lt.s32.totalorder %s9, 3
        %s132 = scalar_select %p131, %s9, 3
        %s133 = smul.addr %s132, 8
        %s134 = scalar_lea.vmem %s0, %s133
      $region28: #{simple_bvh_net_bn_forward.1} parent=23 // pred_fallthru
        _
    $region24: #{simple_bvh_net_bn_forward.1} parent=5 // pred_fallthru
      _
    %p135 = scmp.le.s32.totalorder 1, %s9
    %p136 = scmp.lt.s32.totalorder %s9, 5
    %p137 = pnand %p135, %p136
    %p138 = pneg %p137
    // Predicated region
    $region29: #{simple_bvh_net_bn_forward.1} parent=5 // pred_check
      _
    $region30: #{simple_bvh_net_bn_forward.1} parent=5 // pred_check_branch
      %140 = sbr.rel (%p137) target = $region32
    $region31: #{simple_bvh_net_bn_forward.1} parent=5 // pred_region
      %s141 = ssub.s32 %s9, 1
      %p142 = scmp.lt.s32.totalorder %s14, 3
      %s143 = scalar_select %p142, %s14, 3
      %s144 = smul.addr %s143, 8
      %s145 = scalar_lea.vmem %s0, %s144
      %p146 = pneg %p35
      %p147 = pneg %p32
      %p148 = pneg %p56
      %p149 = pneg %p53
      %p150 = pneg %p77
      %p151 = pneg %p74
      %p152 = pneg %p103
      %p153 = pneg %p100
      %p154 = scmp.lt.s32.totalorder %s14, 3
      %s155 = scalar_select %p154, %s14, 3
      %s156 = smul.addr %s155, 8
      %s157 = scalar_lea.vmem %s3, %s156
      %p158 = scmp.lt.s32.totalorder %s14, 3
      %s159 = scalar_select %p158, %s14, 3
      %s160 = smul.addr %s159, 8
      %s161 = scalar_lea.vmem %s0, %s160
      %p162 = scmp.lt.s32.totalorder %s14, 3
      %s163 = scalar_select %p162, %s14, 3
      %s164 = smul.addr %s163, 8
      %s165 = scalar_lea.vmem %s3, %s164
      %v167 = vld [vmem:[%s161] sm:$0xff]
      %v168 = vld [vmem:[%s1] sm:$0xf]
      %v169 = vld [vmem:[%s1 + $0x4] sm:$0xf]
      %v170 = vld [vmem:[%s1 + $0x8] sm:$0xf]
      %v171 = vld [vmem:[%s1 + $0xc] sm:$0xf]
      %v172 = vld [vmem:[%s1 + $0x10] sm:$0xf]
      %v173 = vld [vmem:[%s1 + $0x14] sm:$0xf]
      %v174 = vld [vmem:[%s1 + $0x18] sm:$0xf]
      %v175 = vld [vmem:[%s1 + $0x1c] sm:$0xf]
      %v176 = vld [vmem:[%s1 + $0x20] sm:$0xf]
      %v177 = vld [vmem:[%s1 + $0x24] sm:$0xf]
      %v178 = vld [vmem:[%s2] sm:$0x1]
      %v179 = vpack.c.bf16 %v167, %v167
      %v180 = vlaneseq
      %v181 = vshrl.u32 %v180, 7
      %v182 = vsub.s32 0, %v181
      %v183 = vrot.slane %v178, %v182
      %v194 = vunpack.c.l.b16 %v168
      %v195 = vunpack.c.l.b16 %v169
      %v196 = vunpack.c.l.b16 %v170
      %v197 = vunpack.c.l.b16 %v171
      %v198 = vunpack.c.l.b16 %v172
      %v199 = vunpack.c.l.b16 %v173
      %v200 = vunpack.c.l.b16 %v174
      %v201 = vunpack.c.l.b16 %v175
      %v202 = vunpack.c.l.b16 %v176
      %v203 = vunpack.c.l.b16 %v177
      %v204 = vpack.c.b16 %v195, %v194
      %v205 = vpack.c.b16 %v197, %v196
      %v206 = vpack.c.b16 %v199, %v198
      %v207 = vpack.c.b16 %v201, %v200
      %v208 = vpack.c.b16 %v203, %v202
      %vm214 = vcmask 654336
      %v216 = vsel %vm214, %v179, 0
      %218 = vmatprep.subr.bf16.mxu0 0
      %219 = vmatpush1.bf16.msra.mxu0 %v204
      %220 = vmatprep.subr.bf16.mxu0 0
      %221 = vmatpush1.bf16.msra.mxu0 %v205
      %222 = vmatprep.subr.bf16.mxu0 0
      %223 = vmatpush1.bf16.msra.mxu0 %v206
      %224 = vmatprep.subr.bf16.mxu0 0
      %225 = vmatpush1.bf16.msra.mxu0 %v207
      %226 = vmatprep.subr.bf16.mxu0 0
      %227 = vmatpush1.bf16.msra.mxu0 %v208
      %228 = vmatprep.subr.bf16.mxu0 0
      %229 = vmatpush1.bf16.msra.mxu0 0
      %230 = vmatprep.subr.bf16.mxu0 0
      %231 = vmatpush1.bf16.msra.mxu0 0
      %232 = vmatprep.subr.bf16.mxu0 0
      %233 = vmatpush1.bf16.msra.mxu0 0
      %234 = vmatprep.subr.bf16.mxu0 0
      %235 = vmatpush1.bf16.msra.mxu0 0
      %236 = vmatprep.subr.bf16.mxu0 0
      %237 = vmatpush1.bf16.msra.mxu0 0
      %238 = vmatprep.subr.bf16.mxu0 0
      %239 = vmatpush1.bf16.msra.mxu0 0
      %240 = vmatprep.subr.bf16.mxu0 0
      %241 = vmatpush1.bf16.msra.mxu0 0
      %242 = vmatprep.subr.bf16.mxu0 0
      %243 = vmatpush1.bf16.msra.mxu0 0
      %244 = vmatprep.subr.bf16.mxu0 0
      %245 = vmatpush1.bf16.msra.mxu0 0
      %246 = vmatprep.subr.bf16.mxu0 0
      %247 = vmatpush1.bf16.msra.mxu0 0
      %248 = vmatprep.subr.bf16.mxu0 0
      %249 = vmatpush1.bf16.msra.mxu0 0
      %250 = vmatprep.mubr.bf16.mxu0 0
      %251 = vmatmul.mubr.bf16.gmra.mrb[0].mxu0 %v216
      %v252 = vpop.f32.mrb[0].mxu0
      %v253 = vadd.f32 %v183, %v252
      %v254 = vpop.f32.mrb[0].mxu0
      %v255 = vpop.f32.mrb[0].mxu0
      %v256 = vpop.f32.mrb[0].mxu0
      %257 = vdwg.mxu0
      %v258 = vmax.f32 %v253, 0.0
      %v259 = vrot.slane %v258, 4
      %v260 = vadd.f32 %v258, %v259
      %v261 = vrot.slane %v260, 2
      %v262 = vadd.f32 %v260, %v261
      %v263 = vrot.slane %v262, 1
      %v264 = vadd.f32 %v262, %v263
      %v265 = vmul.f32 %v264, 0.125
      %v266 = vsub.f32 %v258, %v265
      %v267 = vmul.f32 %v266, %v266
      %v268 = vrot.slane %v267, 4
      %v269 = vadd.f32 %v267, %v268
      %v270 = vrot.slane %v269, 2
      %v271 = vadd.f32 %v269, %v270
      %v272 = vrot.slane %v271, 1
      %v273 = vadd.f32 %v271, %v272
      %v274 = vmul.f32 %v273, 0.125
      %v275 = vadd.f32 %v274, 1e-05
      %v276 = vrsqrt.pop %v275
      %v277 = vmul.f32 %v266, %v276
      %v278 = vld [vmem:[%s1 + $0x28] sm:$0xf]
      %v279 = vld [vmem:[%s1 + $0x2c] sm:$0xf]
      %v280 = vld [vmem:[%s1 + $0x30] sm:$0xf]
      %v281 = vld [vmem:[%s1 + $0x34] sm:$0xf]
      %v282 = vld [vmem:[%s2 + $0x8] sm:$0x1]
      %v283 = vpack.c.bf16 %v277, %v277
      %v284 = vlaneseq
      %v285 = vshrl.u32 %v284, 7
      %v286 = vsub.s32 0, %v285
      %v287 = vrot.slane %v282, %v286
      %v292 = vunpack.c.l.b16 %v278
      %v293 = vunpack.c.l.b16 %v279
      %v294 = vunpack.c.l.b16 %v280
      %v295 = vunpack.c.l.b16 %v281
      %v296 = vpack.c.b16 %v293, %v292
      %v297 = vpack.c.b16 %v295, %v294
      %vm300 = vcmask 261120
      %v302 = vsel %vm300, %v283, 0
      %304 = vmatprep.subr.bf16.mxu0 0
      %305 = vmatpush1.bf16.msra.mxu0 %v296
      %306 = vmatprep.subr.bf16.mxu0 0
      %307 = vmatpush1.bf16.msra.mxu0 %v297
      %308 = vmatprep.subr.bf16.mxu0 0
      %309 = vmatpush1.bf16.msra.mxu0 0
      %310 = vmatprep.subr.bf16.mxu0 0
      %311 = vmatpush1.bf16.msra.mxu0 0
      %312 = vmatprep.subr.bf16.mxu0 0
      %313 = vmatpush1.bf16.msra.mxu0 0
      %314 = vmatprep.subr.bf16.mxu0 0
      %315 = vmatpush1.bf16.msra.mxu0 0
      %316 = vmatprep.subr.bf16.mxu0 0
      %317 = vmatpush1.bf16.msra.mxu0 0
      %318 = vmatprep.subr.bf16.mxu0 0
      %319 = vmatpush1.bf16.msra.mxu0 0
      %320 = vmatprep.subr.bf16.mxu0 0
      %321 = vmatpush1.bf16.msra.mxu0 0
      %322 = vmatprep.subr.bf16.mxu0 0
      %323 = vmatpush1.bf16.msra.mxu0 0
      %324 = vmatprep.subr.bf16.mxu0 0
      %325 = vmatpush1.bf16.msra.mxu0 0
      %326 = vmatprep.subr.bf16.mxu0 0
      %327 = vmatpush1.bf16.msra.mxu0 0
      %328 = vmatprep.subr.bf16.mxu0 0
      %329 = vmatpush1.bf16.msra.mxu0 0
      %330 = vmatprep.subr.bf16.mxu0 0
      %331 = vmatpush1.bf16.msra.mxu0 0
      %332 = vmatprep.subr.bf16.mxu0 0
      %333 = vmatpush1.bf16.msra.mxu0 0
      %334 = vmatprep.subr.bf16.mxu0 0
      %335 = vmatpush1.bf16.msra.mxu0 0
      %336 = vmatprep.mubr.bf16.mxu0 0
      %337 = vmatmul.mubr.bf16.gmra.mrb[0].mxu0 %v302
      %v338 = vpop.f32.mrb[0].mxu0
      %v339 = vadd.f32 %v287, %v338
      %v340 = vpop.f32.mrb[0].mxu0
      %v341 = vpop.f32.mrb[0].mxu0
      %v342 = vpop.f32.mrb[0].mxu0
      %343 = vdwg.mxu0
      %v344 = vmax.f32 %v339, 0.0
      %v345 = vrot.slane %v344, 4
      %v346 = vadd.f32 %v344, %v345
      %v347 = vrot.slane %v346, 2
      %v348 = vadd.f32 %v346, %v347
      %v349 = vrot.slane %v348, 1
      %v350 = vadd.f32 %v348, %v349
      %v351 = vmul.f32 %v350, 0.125
      %v352 = vsub.f32 %v344, %v351
      %v353 = vmul.f32 %v352, %v352
      %v354 = vrot.slane %v353, 4
      %v355 = vadd.f32 %v353, %v354
      %v356 = vrot.slane %v355, 2
      %v357 = vadd.f32 %v355, %v356
      %v358 = vrot.slane %v357, 1
      %v359 = vadd.f32 %v357, %v358
      %v360 = vmul.f32 %v359, 0.125
      %v361 = vadd.f32 %v360, 1e-05
      %v362 = vrsqrt.pop %v361
      %v363 = vmul.f32 %v352, %v362
      %v364 = vld [vmem:[%s1 + $0x38] sm:$0xf]
      %v365 = vld [vmem:[%s1 + $0x3c] sm:$0xf]
      %v366 = vld [vmem:[%s1 + $0x40] sm:$0xf]
      %v367 = vld [vmem:[%s1 + $0x44] sm:$0xf]
      %v368 = vld [vmem:[%s1 + $0x48] sm:$0xf]
      %v369 = vld [vmem:[%s1 + $0x4c] sm:$0xf]
      %v370 = vld [vmem:[%s1 + $0x50] sm:$0xf]
      %v371 = vld [vmem:[%s1 + $0x54] sm:$0xf]
      %v372 = vld [vmem:[%s2 + $0x10] sm:$0x1]
      %v373 = vpack.c.bf16 %v363, %v363
      %v374 = vlaneseq
      %v375 = vshrl.u32 %v374, 7
      %v376 = vsub.s32 0, %v375
      %v377 = vrot.slane %v372, %v376
      %v386 = vunpack.c.l.b16 %v364
      %v387 = vunpack.c.l.b16 %v365
      %v388 = vunpack.c.l.b16 %v366
      %v389 = vunpack.c.l.b16 %v367
      %v390 = vunpack.c.l.b16 %v368
      %v391 = vunpack.c.l.b16 %v369
      %v392 = vunpack.c.l.b16 %v370
      %v393 = vunpack.c.l.b16 %v371
      %v394 = vpack.c.b16 %v387, %v386
      %v395 = vpack.c.b16 %v389, %v388
      %v396 = vpack.c.b16 %v391, %v390
      %v397 = vpack.c.b16 %v393, %v392
      %vm402 = vcmask 523264
      %v404 = vsel %vm402, %v373, 0
      %406 = vmatprep.subr.bf16.mxu0 0
      %407 = vmatpush1.bf16.msra.mxu0 %v394
      %408 = vmatprep.subr.bf16.mxu0 0
      %409 = vmatpush1.bf16.msra.mxu0 %v395
      %410 = vmatprep.subr.bf16.mxu0 0
      %411 = vmatpush1.bf16.msra.mxu0 %v396
      %412 = vmatprep.subr.bf16.mxu0 0
      %413 = vmatpush1.bf16.msra.mxu0 %v397
      %414 = vmatprep.subr.bf16.mxu0 0
      %415 = vmatpush1.bf16.msra.mxu0 0
      %416 = vmatprep.subr.bf16.mxu0 0
      %417 = vmatpush1.bf16.msra.mxu0 0
      %418 = vmatprep.subr.bf16.mxu0 0
      %419 = vmatpush1.bf16.msra.mxu0 0
      %420 = vmatprep.subr.bf16.mxu0 0
      %421 = vmatpush1.bf16.msra.mxu0 0
      %422 = vmatprep.subr.bf16.mxu0 0
      %423 = vmatpush1.bf16.msra.mxu0 0
      %424 = vmatprep.subr.bf16.mxu0 0
      %425 = vmatpush1.bf16.msra.mxu0 0
      %426 = vmatprep.subr.bf16.mxu0 0
      %427 = vmatpush1.bf16.msra.mxu0 0
      %428 = vmatprep.subr.bf16.mxu0 0
      %429 = vmatpush1.bf16.msra.mxu0 0
      %430 = vmatprep.subr.bf16.mxu0 0
      %431 = vmatpush1.bf16.msra.mxu0 0
      %432 = vmatprep.subr.bf16.mxu0 0
      %433 = vmatpush1.bf16.msra.mxu0 0
      %434 = vmatprep.subr.bf16.mxu0 0
      %435 = vmatpush1.bf16.msra.mxu0 0
      %436 = vmatprep.subr.bf16.mxu0 0
      %437 = vmatpush1.bf16.msra.mxu0 0
      %438 = vmatprep.mubr.bf16.mxu0 0
      %439 = vmatmul.mubr.bf16.gmra.mrb[0].mxu0 %v404
      %v440 = vpop.f32.mrb[0].mxu0
      %v441 = vadd.f32 %v377, %v440
      %v442 = vpop.f32.mrb[0].mxu0
      %v443 = vpop.f32.mrb[0].mxu0
      %v444 = vpop.f32.mrb[0].mxu0
      %445 = vdwg.mxu0
      %446 = vst [vmem:[%s165] sm:$0xff] %v441
      %p447 = scmp.lt.s32.totalorder %s14, 3
      %s448 = scalar_select %p447, %s14, 3
      %s449 = smul.addr %s448, 8
      %s450 = scalar_lea.vmem %s3, %s449
      // Predicated region
      $region33: #{simple_bvh_net_bn_forward.1} parent=31 // pred_check
        %p451 = pneg %p100
      $region34: #{simple_bvh_net_bn_forward.1} parent=31 // pred_check_branch
        %453 = sbr.rel (%p451) target = $region36
      $region35: #{simple_bvh_net_bn_forward.1} parent=31 // pred_region
        _
      $region36: #{simple_bvh_net_bn_forward.1} parent=31 // pred_fallthru
        _
    $region32: #{simple_bvh_net_bn_forward.1} parent=5 // pred_fallthru
      _
    %p454 = scmp.le.s32.totalorder 2, %s9
    // Predicated region
    $region37: #{simple_bvh_net_bn_forward.1} parent=5 // pred_check
      %p455 = pneg %p454
    $region38: #{simple_bvh_net_bn_forward.1} parent=5 // pred_check_branch
      %457 = sbr.rel (%p455) target = $region40
    $region39: #{simple_bvh_net_bn_forward.1} parent=5 // pred_region
      %s458 = ssub.s32 %s9, 2
      // Predicated region
      $region41: #{simple_bvh_net_bn_forward.1} parent=39 // pred_check
        %p459 = pneg %p106
      $region42: #{simple_bvh_net_bn_forward.1} parent=39 // pred_check_branch
        %461 = sbr.rel (%p459) target = $region44
      $region43: #{simple_bvh_net_bn_forward.1} parent=39 // pred_region
        %p462 = scmp.lt.s32.totalorder %s15, 3
        %s463 = scalar_select %p462, %s15, 3
        %s464 = smul.addr %s463, 8
        %s465 = scalar_lea.vmem %s3, %s464
      $region44: #{simple_bvh_net_bn_forward.1} parent=39 // pred_fallthru
        _
    $region40: #{simple_bvh_net_bn_forward.1} parent=5 // pred_fallthru
      _
  $region6: #{simple_bvh_net_bn_forward.1} parent=0 // loop_footer
    %s13 = sadd.s32 1, %s9
  $region7: #{simple_bvh_net_bn_forward.1} parent=0 // loop_footer_branch
    %8 = sbr.rel target = $region3
  $region8: #{simple_bvh_net_bn_forward.1} parent=0 // loop_exit
    _

</llo_original>
